<compile_context>
chip_gen: v5e
topology: v5e:2x2
jax: 0.10.0
libtpu: 0.0.40
codegen_flags: <defaults>
</compile_context>

<pallas_src>
import jax
import jax.numpy as jnp
from jax.experimental import pallas as pl
from jax.experimental.pallas import tpu as pltpu


def _round_up(x: int, m: int) -> int:
    return ((x + m - 1) // m) * m


# ----------------------------------------------------------------------------
# Kernels
# ----------------------------------------------------------------------------
def _linear_kernel_single_k(x_ref, w_ref, b_ref, o_ref):
    # Whole reduction fits one tile: no accumulator scratch, no pl.when.
    o_ref[...] = (
        jnp.dot(x_ref[...], w_ref[...], preferred_element_type=jnp.float32)
        + b_ref[...]
    ).astype(o_ref.dtype)


def _linear_kernel_multi_k(x_ref, w_ref, b_ref, o_ref, acc_ref):
    k = pl.program_id(2)

    @pl.when(k == 0)
    def _init():
        acc_ref[...] = jnp.zeros_like(acc_ref)

    acc_ref[...] += jnp.dot(
        x_ref[...], w_ref[...], preferred_element_type=jnp.float32
    )

    @pl.when(k == pl.num_programs(2) - 1)
    def _finalize():
        # Bias added exactly once, in the epilogue.
        o_ref[...] = (acc_ref[...] + b_ref[...]).astype(o_ref.dtype)


# ----------------------------------------------------------------------------
# Pallas dispatch (operates on pre-padded, tile-aligned operands)
# ----------------------------------------------------------------------------
def _pallas_linear(x_p, w_p, b_p, *, tm, tn, tk, out_dtype):
    Bp, Kp = x_p.shape
    Np = w_p.shape[1]
    gm, gn, gk = Bp // tm, Np // tn, Kp // tk

    in_itemsize = jnp.dtype(x_p.dtype).itemsize
    out_itemsize = jnp.dtype(out_dtype).itemsize

    cost = pl.CostEstimate(
        flops=2 * Bp * Kp * Np,
        transcendentals=0,
        bytes_accessed=in_itemsize * (Bp * Kp + Kp * Np + Np)
        + out_itemsize * Bp * Np,
    )

    # Double-buffered x / w / out tiles (+ f32 accumulator when K is tiled).
    vmem_bytes = (
        in_itemsize * (2 * tm * tk + 2 * tk * tn + 2 * tn)
        + out_itemsize * 2 * tm * tn
    )
    if gk > 1:
        vmem_bytes += 4 * tm * tn
    # Headroom, floor at the smallest scoped default (v5e), cap well under
    # v7x's 64 MiB physical VMEM per TensorCore.
    vmem_limit = int(min(max(2 * vmem_bytes, 16 << 20), 48 << 20))

    if gk == 1:
        grid_spec = pltpu.PrefetchScalarGridSpec(
            num_scalar_prefetch=0,
            grid=(gm, gn),
            in_specs=[
                pl.BlockSpec((tm, tk), lambda i, j: (i, 0)),
                pl.BlockSpec((tk, tn), lambda i, j: (0, j)),
                pl.BlockSpec((1, tn), lambda i, j: (0, j)),
            ],
            out_specs=pl.BlockSpec((tm, tn), lambda i, j: (i, j)),
        )
        kernel = _linear_kernel_single_k
        dims = ("parallel", "parallel")
    else:
        grid_spec = pltpu.PrefetchScalarGridSpec(
            num_scalar_prefetch=0,
            grid=(gm, gn, gk),
            in_specs=[
                pl.BlockSpec((tm, tk), lambda i, j, k: (i, k)),
                pl.BlockSpec((tk, tn), lambda i, j, k: (k, j)),
                # Bias tile depends only on j -> resident across the K loop.
                pl.BlockSpec((1, tn), lambda i, j, k: (0, j)),
            ],
            out_specs=pl.BlockSpec((tm, tn), lambda i, j, k: (i, j)),
            scratch_shapes=[pltpu.VMEM((tm, tn), jnp.float32)],
        )
        kernel = _linear_kernel_multi_k
        dims = ("parallel", "parallel", "arbitrary")

    return pl.pallas_call(
        kernel,
        out_shape=jax.ShapeDtypeStruct((Bp, Np), out_dtype),
        grid_spec=grid_spec,
        compiler_params=pltpu.CompilerParams(
            dimension_semantics=dims,
            vmem_limit_bytes=vmem_limit,
        ),
        cost_estimate=cost,
    )(x_p, w_p, b_p)


# ----------------------------------------------------------------------------
# Tile-size heuristic and parameter-hoisting factory
# ----------------------------------------------------------------------------
def _tile_sizes(d_in, d_out, *, tn_max=512, tk_max=1024):
    # Grow tk before tn: with small batches this GEMV-like workload is
    # weight-stream bound, so fewer K grid steps > wider N tiles.
    tk = min(_round_up(d_in, 128), tk_max)
    tn = min(_round_up(d_out, 128), tn_max)
    # Ensure >=2 N tiles when D_out allows it, so both v7x TensorCores get
    # work even when the batch fills only one M tile.
    while _round_up(d_out, tn) // tn < 2 and tn > 256 and d_out > tn // 2:
        tn //= 2
    return tn, tk


def make_vfl_classifier(
    w,
    b=None,
    *,
    compute_dtype=None,      # e.g. jnp.bfloat16 for native MXU rate
    force_pallas=False,
    keep_padded_output=False,
    min_pallas_flops=1 << 25,
    tm_max=256,
    tn_max=512,
    tk_max=1024,
):
    """Returns a jitted forward(x) implementing nn.Linear(x) = x @ w + b.

    w: (D_in, D_out); b: (D_out,) or None (bias=False).
    Padding (and the optional compute-dtype cast) of w/b happens once, here,
    not in the per-call hot path.
    """
    d_in, d_out = w.shape
    if b is None:
        b = jnp.zeros((d_out,), dtype=w.dtype)

    tn, tk = _tile_sizes(d_in, d_out, tn_max=tn_max, tk_max=tk_max)
    kp = _round_up(d_in, tk)
    np_ = _round_up(d_out, tn)

    w_dev = w.astype(compute_dtype) if compute_dtype is not None else w
    w_p = jnp.pad(w_dev, ((0, kp - d_in), (0, np_ - d_out)))
    b_p = jnp.pad(b, (0, np_ - d_out)).reshape(1, np_)  # bias kept full precision

    def forward(x):
        batch = x.shape[0]
        if not force_pallas and 2 * batch * d_in * d_out < min_pallas_flops:
            # Tiny problem: a standalone Pallas call is pure overhead; let
            # XLA fuse the matmul with its neighbours instead.
            return x @ w + b

        tm = min(_round_up(batch, 8), tm_max)
        bp = _round_up(batch, tm)
        x_dev = x.astype(compute_dtype) if compute_dtype is not None else x
        x_p = jnp.pad(x_dev, ((0, bp - batch), (0, kp - d_in)))

        out_p = _pallas_linear(
            x_p, w_p, b_p, tm=tm, tn=tn, tk=tk, out_dtype=x.dtype
        )
        if keep_padded_output:
            return out_p  # lane-dense (Bp, Np); caller slices where it fuses
        return out_p[:batch, :d_out]

    return jax.jit(forward)


# Convenience one-shot entry (pads weights per call; prefer the factory).
def vfl_classifier_forward(x, w, b, **kwargs):
    return make_vfl_classifier(w, b, **kwargs)(x)


# ----------------------------------------------------------------------------
# Self-test
# ----------------------------------------------------------------------------
if __name__ == "__main__":
    # Small shapes consistent with the module: batch=8, input_dim=32, output_dim=16
    batch, input_dim, output_dim = 8, 32, 16

    key = jax.random.PRNGKey(0)
    kx, kw, kb = jax.random.split(key, 3)

    # Deterministic parameter init (mimics nn.Linear's U(-1/sqrt(fan_in), ...)).
    bound = 1.0 / (input_dim ** 0.5)
    w = jax.random.uniform(kw, (input_dim, output_dim), jnp.float32, -bound, bound)
    b = jax.random.uniform(kb, (output_dim,), jnp.float32, -bound, bound)
    x = jax.random.normal(kx, (batch, input_dim), jnp.float32)

    y_ref = x @ w + b

    # 1) Force the Pallas path so the kernel itself is exercised at this size
    #    (single-K specialization, 2-D grid, no accumulator scratch).
    fwd_pallas = make_vfl_classifier(w, b, force_pallas=True)
    y = jax.block_until_ready(fwd_pallas(x))
    assert y.shape == (batch, output_dim)
    assert jnp.allclose(y, y_ref, atol=1e-5, rtol=1e-5)

    # 2) Default (gated) entry: at 8x32x16 it falls back to plain XLA.
    fwd = make_vfl_classifier(w, b)
    y2 = jax.block_until_ready(fwd(x))
    assert jnp.allclose(y2, y_ref, atol=1e-5, rtol=1e-5)

    print("KERNEL_OK")
</pallas_src>

<mosaic_0001>
module attributes {stable_mosaic.version = 11 : i64} {
  func.func @_linear_kernel_single_k(%arg0: i32, %arg1: i32, %arg2: memref<8x128xf32, #tpu.memory_space<vmem>>, %arg3: memref<128x128xf32, #tpu.memory_space<vmem>>, %arg4: memref<1x128xf32, #tpu.memory_space<vmem>>, %arg5: memref<8x128xf32, #tpu.memory_space<vmem>>) attributes {dimension_semantics = [#tpu.dimension_semantics<parallel>, #tpu.dimension_semantics<parallel>], iteration_bounds = array<i64: 1, 1>, scalar_prefetch = 0 : i64, scratch_operands = 0 : i64, tpu.core_type = #tpu.core_type<tc>, window_params = [{transform_indices = @transform_0, window_bounds = array<i64: 8, 128>}, {transform_indices = @transform_1, window_bounds = array<i64: 128, 128>}, {transform_indices = @transform_2, window_bounds = array<i64: 1, 128>}, {transform_indices = @transform_3, window_bounds = array<i64: 8, 128>}]} {
    %c0 = arith.constant 0 : index
    %c0_0 = arith.constant 0 : index
    %0 = vector.load %arg2[%c0, %c0_0] : memref<8x128xf32, #tpu.memory_space<vmem>>, vector<8x128xf32>
    %c0_1 = arith.constant 0 : index
    %c0_2 = arith.constant 0 : index
    %1 = vector.load %arg3[%c0_1, %c0_2] : memref<128x128xf32, #tpu.memory_space<vmem>>, vector<128x128xf32>
    %cst = arith.constant dense<0.000000e+00> : vector<8x128xf32>
    %2 = tpu.matmul %0, %1, %cst {dimension_numbers = #tpu.dot_dimension_numbers<[1], [0], [0], [1], [0, 0, 1, 1], [], []>} : vector<8x128xf32>, vector<128x128xf32>, vector<8x128xf32> -> vector<8x128xf32>
    %c0_3 = arith.constant 0 : index
    %c0_4 = arith.constant 0 : index
    %3 = vector.load %arg4[%c0_3, %c0_4] : memref<1x128xf32, #tpu.memory_space<vmem>>, vector<1x128xf32>
    %4 = vector.broadcast %3 : vector<1x128xf32> to vector<8x128xf32>
    %5 = arith.addf %2, %4 : vector<8x128xf32>
    %c0_5 = arith.constant 0 : index
    %c0_6 = arith.constant 0 : index
    %6 = vector.load %arg5[%c0_5, %c0_6] : memref<8x128xf32, #tpu.memory_space<vmem>>, vector<8x128xf32>
    tpu.vector_store %arg5[%c0_5, %c0_6], %5 {strides = array<i32>} : memref<8x128xf32, #tpu.memory_space<vmem>>, vector<8x128xf32>,
    return
  }
  func.func @transform_0(%arg0: i32, %arg1: i32) -> (i32, i32) {
    %c0_i32 = arith.constant 0 : i32
    %c0_i32_0 = arith.constant 0 : i32
    return %arg0, %c0_i32 : i32, i32
  }
  func.func @transform_1(%arg0: i32, %arg1: i32) -> (i32, i32) {
    %c0_i32 = arith.constant 0 : i32
    %c0_i32_0 = arith.constant 0 : i32
    return %c0_i32, %arg1 : i32, i32
  }
  func.func @transform_2(%arg0: i32, %arg1: i32) -> (i32, i32) {
    %c0_i32 = arith.constant 0 : i32
    %c0_i32_0 = arith.constant 0 : i32
    return %c0_i32, %arg1 : i32, i32
  }
  func.func @transform_3(%arg0: i32, %arg1: i32) -> (i32, i32) {
    %c0_i32 = arith.constant 0 : i32
    return %arg0, %arg1 : i32, i32
  }
}

</mosaic_0001>

<llo_original>
// kernel: forward.1
$region0: #{forward.1}
  #allocation0 [shape = 'u32[]', space=smem, size = 0x4, offset = 0x4, fixed_abs, tag = 'smem constant byte address 0x4 - core index']
  #allocation1 [shape = 'u32[72,128]{1,0:T(1,128)}', space=vmem, size = 0x9000, scoped, tag = 'internal scratch']
  %s0 = inlined_call_operand.vmem [shape: f32[8,128], index: 0, kind: input, shape index: {}]
  %s1 = inlined_call_operand.hbm [shape: f32[128,128], index: 1, kind: input, shape index: {}]
  %s2 = inlined_call_operand.vmem [shape: f32[1,128], index: 2, kind: input, shape index: {}]
  %s3 = inlined_call_operand.hbm [shape: f32[8,128], index: 3, kind: output, shape index: {}]
  %s4 = sld [smem:[#allocation0]]
  $region26: #{forward.1} parent=0
    _
  %s6 = ssub.s32 1, %s4
  %s7 = scalar_select 0, %s6, %s4
  $region1: #{forward.1} parent=0
    #allocation2 [shape = 'u8[65536]{0}', space=vmem, size = 0x10000, scoped, tag = 'input window, operand 1, single buffered']
    #allocation3 [shape = 's32[1]{0}', space=sflag, size = 0x4, scoped, tag = 'scoped memory for forward.1']
    #allocation4 [shape = 's32[1]{0}', space=sflag, size = 0x4, scoped, tag = 'scoped memory for forward.1']
    #allocation5 [shape = 'u8[4096]{0}', space=vmem, size = 0x1000, scoped, tag = 'output window, operand 0, single buffered']
    %8 = vsyncpa [#allocation3], 0
    %9 = vsyncpa [#allocation4], 0
    // Predicated region
    $region2: #{forward.1} parent=1 // pred_check
      _
    $region3: #{forward.1} parent=1 // pred_check_branch
      %11 = sbr.rel (0) target = $region5
    $region4: #{forward.1} parent=1 // pred_region
      _
    $region5: #{forward.1} parent=1 // pred_fallthru
      _
    // Predicated region
    $region6: #{forward.1} parent=1 // pred_check
      _
    $region7: #{forward.1} parent=1 // pred_check_branch
      %13 = sbr.rel (0) target = $region9
    $region8: #{forward.1} parent=1 // pred_region
      %15 = vsyncadd [#allocation3], 0
      %s16 = sshll.u32 %s1, 4
      %s17 = int_to_ptr.hbm [resolvable:$true] %s16
      %s18 = sshll.u32 [#allocation2], 4
      %s19 = int_to_ptr.vmem [resolvable:$true] %s18
      %24 = dma.hbm_to_vmem [thread:$0]  %s17, 2048, %s19, [#allocation3], 128, 128, 8
    $region9: #{forward.1} parent=1 // pred_fallthru
      _
    // Predicated region
    $region10: #{forward.1} parent=1 // pred_check
      _
    $region11: #{forward.1} parent=1 // pred_check_branch
      %26 = sbr.rel (0) target = $region13
    $region12: #{forward.1} parent=1 // pred_region
      _
    $region13: #{forward.1} parent=1 // pred_fallthru
      _
    // Predicated region
    $region14: #{forward.1} parent=1 // pred_check
      _
    $region15: #{forward.1} parent=1 // pred_check_branch
      %28 = sbr.rel (0) target = $region17
    $region16: #{forward.1} parent=1 // pred_region
      %30 = dma.done [#allocation3], 2048
    $region17: #{forward.1} parent=1 // pred_fallthru
      _
    %v31 = vld [vmem:[%s0] sm:$0xff]
    %v32 = vld [vmem:[#allocation2] sm:$0xff]
    %v33 = vld [vmem:[#allocation2 + $0x8] sm:$0xff]
    %v34 = vld [vmem:[#allocation2 + $0x10] sm:$0xff]
    %v35 = vld [vmem:[#allocation2 + $0x18] sm:$0xff]
    %v36 = vld [vmem:[#allocation2 + $0x20] sm:$0xff]
    %v37 = vld [vmem:[#allocation2 + $0x28] sm:$0xff]
    %v38 = vld [vmem:[#allocation2 + $0x30] sm:$0xff]
    %v39 = vld [vmem:[#allocation2 + $0x38] sm:$0xff]
    %v40 = vld [vmem:[#allocation2 + $0x40] sm:$0xff]
    %v41 = vld [vmem:[#allocation2 + $0x48] sm:$0xff]
    %v42 = vld [vmem:[#allocation2 + $0x50] sm:$0xff]
    %v43 = vld [vmem:[#allocation2 + $0x58] sm:$0xff]
    %v44 = vld [vmem:[#allocation2 + $0x60] sm:$0xff]
    %v45 = vld [vmem:[#allocation2 + $0x68] sm:$0xff]
    %v46 = vld [vmem:[#allocation2 + $0x70] sm:$0xff]
    %v47 = vld [vmem:[#allocation2 + $0x78] sm:$0xff]
    %v48 = vld [vmem:[%s2] sm:$0x1]
    %v50 = vperm.slane %v48, 0
    %52 = vmatpush.msra.mxu0 %v47
    %53 = vmatpush.msra.mxu0 %v46
    %54 = vmatpush.msra.mxu0 %v45
    %55 = vmatpush.msra.mxu0 %v44
    %56 = vmatpush.msra.mxu0 %v43
    %57 = vmatpush.msra.mxu0 %v42
    %58 = vmatpush.msra.mxu0 %v41
    %59 = vmatpush.msra.mxu0 %v40
    %60 = vmatpush.msra.mxu0 %v39
    %61 = vmatpush.msra.mxu0 %v38
    %62 = vmatpush.msra.mxu0 %v37
    %63 = vmatpush.msra.mxu0 %v36
    %64 = vmatpush.msra.mxu0 %v35
    %65 = vmatpush.msra.mxu0 %v34
    %66 = vmatpush.msra.mxu0 %v33
    %67 = vmatpush.msra.mxu0 %v32
    %68 = vmatmul.f32.gmra.mxu0 %v31
    %v69 = vpop.f32.mrf.mxu0
    %v70 = vadd.f32 %v50, %v69
    %71 = vdwg.mxu0
    %72 = vst [vmem:[#allocation5] sm:$0xff] %v70
    // Predicated region
    $region18: #{forward.1} parent=1 // pred_check
      _
    $region19: #{forward.1} parent=1 // pred_check_branch
      %74 = sbr.rel (0) target = $region21
    $region20: #{forward.1} parent=1 // pred_region
      %76 = vsyncadd [#allocation4], 0
      %s78 = sshll.u32 [#allocation5], 4
      %s79 = int_to_ptr.vmem [resolvable:$true] %s78
      %s80 = sshll.u32 %s3, 4
      %s81 = int_to_ptr.hbm [resolvable:$true] %s80
      %83 = dma.vmem_to_hbm [thread:$0]  %s79, 128, %s81, [#allocation4]
    $region21: #{forward.1} parent=1 // pred_fallthru
      _
    // Predicated region
    $region22: #{forward.1} parent=1 // pred_check
      _
    $region23: #{forward.1} parent=1 // pred_check_branch
      %85 = sbr.rel (0) target = $region25
    $region24: #{forward.1} parent=1 // pred_region
      %87 = dma.done [#allocation4], 128
    $region25: #{forward.1} parent=1 // pred_fallthru
      _
    %88 = vsyncpa [#allocation3], 1
    %89 = vsyncpa [#allocation4], 1

</llo_original>
